<compile_context>
chip_gen: v7x
topology: tpu7x:2x2x1
jax: 0.10.0
libtpu: 0.0.40
codegen_flags: <defaults>
</compile_context>

<pallas_src>
import functools

import jax
import jax.numpy as jnp
from jax.experimental import pallas as pl
from jax.experimental.pallas import tpu as pltpu


def _round_up(x, m):
    return (x + m - 1) // m * m


def _nmae_kernel(pred_ref, labels_ref, out_ref, *, num_classes, scale,
                 total_n, block_n):
    # pred_ref:   (C, TN)  native dtype, VMEM  (classes on sublanes, batch on lanes)
    # labels_ref: (1, TN)  int32, VMEM
    # out_ref:    (1, 1)   float32, SMEM (resident accumulator / final scalar)
    i = pl.program_id(0)

    @pl.when(i == 0)
    def _():
        out_ref[0, 0] = jnp.float32(0.0)

    x = pred_ref[...].astype(jnp.float32)                 # (C, TN)
    labels = labels_ref[...]                              # (1, TN) int32

    # --- softmax pieces over the class (sublane) axis; probs never built ---
    col_max = jnp.max(x, axis=0, keepdims=True)           # (1, TN)
    exps = jnp.exp(x - col_max)                           # (C, TN)
    denom = jnp.sum(exps, axis=0, keepdims=True)          # (1, TN)

    class_idx = jax.lax.broadcasted_iota(jnp.int32, x.shape, 0)   # (C, TN)
    picked_exp = jnp.sum(
        jnp.where(class_idx == labels, exps, 0.0), axis=0, keepdims=True
    )                                                     # (1, TN)

    loss = 1.0 - picked_exp / denom                       # (1, TN)

    # --- mask rows past the true batch size (ragged last block) ---
    col_idx = jax.lax.broadcasted_iota(jnp.int32, loss.shape, 1) + i * block_n
    loss = jnp.where(col_idx < total_n, loss, 0.0)

    out_ref[0, 0] += jnp.sum(loss)

    @pl.when(i == pl.num_programs(0) - 1)
    def _():
        norm = jnp.float32(scale) / jnp.float32((num_classes - 1) * total_n)
        out_ref[0, 0] = out_ref[0, 0] * norm


def nmae_loss(pred, labels, *, num_classes=10, scale=1.0, block_n=2048):
    """pred: (N, C) float (f32 or bf16); labels: (N,) integer class ids."""
    n, c = pred.shape
    assert c == num_classes

    labels = labels.astype(jnp.int32)

    # Lane-dense layout: classes on sublanes, batch on lanes.
    pred_t = pred.T                                        # (C, N)

    tn = min(block_n, _round_up(n, 128))                   # multiple of 128
    n_pad = _round_up(n, tn)
    if n_pad != n:
        pred_t = jnp.pad(pred_t, ((0, 0), (0, n_pad - n)))
        labels = jnp.pad(labels, (0, n_pad - n))
    labels2d = labels.reshape(1, n_pad)

    num_blocks = n_pad // tn
    kernel = functools.partial(
        _nmae_kernel,
        num_classes=num_classes,
        scale=scale,
        total_n=n,
        block_n=tn,
    )

    out = pl.pallas_call(
        kernel,
        out_shape=jax.ShapeDtypeStruct((1, 1), jnp.float32),
        grid_spec=pltpu.PrefetchScalarGridSpec(
            num_scalar_prefetch=0,
            grid=(num_blocks,),
            in_specs=[
                pl.BlockSpec((c, tn), lambda i: (0, i)),
                pl.BlockSpec((1, tn), lambda i: (0, i)),
            ],
            out_specs=pl.BlockSpec(memory_space=pltpu.MemorySpace.SMEM),
        ),
        compiler_params=pltpu.CompilerParams(
            dimension_semantics=("arbitrary",),
        ),
    )(pred_t, labels2d)
    return out[0, 0]


def _reference_nmae(pred, labels, *, num_classes=10, scale=1.0):
    p = jax.nn.softmax(pred.astype(jnp.float32), axis=1)
    onehot = jax.nn.one_hot(labels, num_classes, dtype=jnp.float32)
    loss = 1.0 - jnp.sum(onehot * p, axis=1)
    return scale * (1.0 / (num_classes - 1)) * jnp.mean(loss)


if __name__ == "__main__":
    num_classes = 10
    scale = 1.0
    batch = 8

    key = jax.random.PRNGKey(0)
    k_pred, k_lab = jax.random.split(key)
    pred = jax.random.normal(k_pred, (batch, num_classes), dtype=jnp.float32)
    labels = jax.random.randint(k_lab, (batch,), 0, num_classes, dtype=jnp.int32)

    out = nmae_loss(pred, labels, num_classes=num_classes, scale=scale)
    jax.block_until_ready(out)

    ref = _reference_nmae(pred, labels, num_classes=num_classes, scale=scale)
    assert jnp.allclose(out, ref, atol=1e-5, rtol=1e-5), (out, ref)

    # Also exercise a ragged / multi-block batch to check tiling + masking.
    batch2 = 300
    k_pred2, k_lab2 = jax.random.split(k_lab)
    pred2 = jax.random.normal(k_pred2, (batch2, num_classes), dtype=jnp.float32)
    labels2 = jax.random.randint(k_lab2, (batch2,), 0, num_classes, dtype=jnp.int32)
    out2 = nmae_loss(pred2, labels2, num_classes=num_classes, scale=scale,
                     block_n=128)
    jax.block_until_ready(out2)
    ref2 = _reference_nmae(pred2, labels2, num_classes=num_classes, scale=scale)
    assert jnp.allclose(out2, ref2, atol=1e-5, rtol=1e-5), (out2, ref2)

    print("KERNEL_OK")
</pallas_src>

<mosaic_0001>
module attributes {stable_mosaic.version = 11 : i64} {
  func.func @_nmae_kernel(%arg0: i32, %arg1: memref<10x128xf32, #tpu.memory_space<vmem>>, %arg2: memref<1x128xi32, #tpu.memory_space<vmem>>, %arg3: memref<1x1xf32, #tpu.memory_space<smem>>) attributes {dimension_semantics = [#tpu.dimension_semantics<arbitrary>], iteration_bounds = array<i64: 1>, scalar_prefetch = 0 : i64, scratch_operands = 0 : i64, tpu.core_type = #tpu.core_type<tc>, window_params = [{transform_indices = @transform_0, window_bounds = array<i64: 10, 128>}, {transform_indices = @transform_1, window_bounds = array<i64: 1, 128>}, {transform_indices = @transform_2, window_bounds = array<i64: 1, 1>}]} {
    %c0_i32 = arith.constant 0 : i32
    %0 = arith.cmpi eq, %arg0, %c0_i32 : i32
    %1 = arith.extui %0 : i1 to i32
    %c0_i32_0 = arith.constant 0 : i32
    %2 = arith.cmpi ne, %1, %c0_i32_0 : i32
    scf.if %2 {
      %cst_16 = arith.constant 0.000000e+00 : f32
      %c0_17 = arith.constant 0 : index
      %c0_18 = arith.constant 0 : index
      %40 = memref.load %arg3[%c0_17, %c0_18] : memref<1x1xf32, #tpu.memory_space<smem>>
      memref.store %cst_16, %arg3[%c0_17, %c0_18] : memref<1x1xf32, #tpu.memory_space<smem>>
    } else {
    }
    %c0 = arith.constant 0 : index
    %c0_1 = arith.constant 0 : index
    %3 = vector.load %arg1[%c0, %c0_1] : memref<10x128xf32, #tpu.memory_space<vmem>>, vector<10x128xf32>
    %c0_2 = arith.constant 0 : index
    %c0_3 = arith.constant 0 : index
    %4 = vector.load %arg2[%c0_2, %c0_3] : memref<1x128xi32, #tpu.memory_space<vmem>>, vector<1x128xi32>
    %cst = arith.constant dense<0xFF800000> : vector<128xf32>
    %5 = vector.multi_reduction <maximumf>, %3, %cst [0] : vector<10x128xf32> to vector<128xf32>
    %6 = vector.shape_cast %5 : vector<128xf32> to vector<1x128xf32>
    %7 = vector.broadcast %6 : vector<1x128xf32> to vector<10x128xf32>
    %8 = arith.subf %3, %7 : vector<10x128xf32>
    %9 = math.exp %8 : vector<10x128xf32>
    %cst_4 = arith.constant dense<0.000000e+00> : vector<128xf32>
    %10 = vector.multi_reduction <add>, %9, %cst_4 [0] : vector<10x128xf32> to vector<128xf32>
    %11 = vector.shape_cast %10 : vector<128xf32> to vector<1x128xf32>
    %12 = tpu.iota {dimensions = array<i32: 0>} : vector<10x128xi32>
    %13 = vector.broadcast %4 : vector<1x128xi32> to vector<10x128xi32>
    %14 = arith.cmpi eq, %12, %13 : vector<10x128xi32>
    %cst_5 = arith.constant 0.000000e+00 : f32
    %15 = vector.broadcast %cst_5 : f32 to vector<10x128xf32>
    %16 = arith.select %14, %9, %15 : vector<10x128xi1>, vector<10x128xf32>
    %cst_6 = arith.constant dense<0.000000e+00> : vector<128xf32>
    %17 = vector.multi_reduction <add>, %16, %cst_6 [0] : vector<10x128xf32> to vector<128xf32>
    %18 = vector.shape_cast %17 : vector<128xf32> to vector<1x128xf32>
    %19 = arith.divf %18, %11 : vector<1x128xf32>
    %cst_7 = arith.constant 1.000000e+00 : f32
    %20 = vector.broadcast %cst_7 : f32 to vector<1x128xf32>
    %21 = arith.subf %20, %19 : vector<1x128xf32>
    %22 = tpu.iota {dimensions = array<i32: 1>} : vector<1x128xi32>
    %c128_i32 = arith.constant 128 : i32
    %23 = arith.muli %arg0, %c128_i32 : i32
    %24 = vector.broadcast %23 : i32 to vector<1x128xi32>
    %25 = arith.addi %22, %24 : vector<1x128xi32>
    %c8_i32 = arith.constant 8 : i32
    %26 = vector.broadcast %c8_i32 : i32 to vector<1x128xi32>
    %27 = arith.cmpi slt, %25, %26 : vector<1x128xi32>
    %cst_8 = arith.constant 0.000000e+00 : f32
    %28 = vector.broadcast %cst_8 : f32 to vector<1x128xf32>
    %29 = arith.select %27, %21, %28 : vector<1x128xi1>, vector<1x128xf32>
    %c0_9 = arith.constant 0 : index
    %c0_10 = arith.constant 0 : index
    %30 = memref.load %arg3[%c0_9, %c0_10] : memref<1x1xf32, #tpu.memory_space<smem>>
    %31 = vector.shape_cast %29 : vector<1x128xf32> to vector<1x1x128xf32>
    %cst_11 = arith.constant dense<0.000000e+00> : vector<1xf32>
    %32 = vector.multi_reduction <add>, %31, %cst_11 [1, 2] : vector<1x1x128xf32> to vector<1xf32>
    %33 = vector.shape_cast %32 : vector<1xf32> to vector<1x1x1xf32>
    %34 = vector.extract %33[0, 0, 0] : f32 from vector<1x1x1xf32>
    %35 = arith.addf %30, %34 : f32
    %c0_12 = arith.constant 0 : index
    %c0_13 = arith.constant 0 : index
    %36 = memref.load %arg3[%c0_12, %c0_13] : memref<1x1xf32, #tpu.memory_space<smem>>
    memref.store %35, %arg3[%c0_12, %c0_13] : memref<1x1xf32, #tpu.memory_space<smem>>
    %c0_i32_14 = arith.constant 0 : i32
    %37 = arith.cmpi eq, %arg0, %c0_i32_14 : i32
    %38 = arith.extui %37 : i1 to i32
    %c0_i32_15 = arith.constant 0 : i32
    %39 = arith.cmpi ne, %38, %c0_i32_15 : i32
    scf.if %39 {
      %cst_16 = arith.constant 1.000000e+00 : f32
      %cst_17 = arith.constant 7.200000e+01 : f32
      %40 = arith.divf %cst_16, %cst_17 : f32
      %c0_18 = arith.constant 0 : index
      %c0_19 = arith.constant 0 : index
      %41 = memref.load %arg3[%c0_18, %c0_19] : memref<1x1xf32, #tpu.memory_space<smem>>
      %42 = arith.mulf %41, %40 : f32
      %c0_20 = arith.constant 0 : index
      %c0_21 = arith.constant 0 : index
      %43 = memref.load %arg3[%c0_20, %c0_21] : memref<1x1xf32, #tpu.memory_space<smem>>
      memref.store %42, %arg3[%c0_20, %c0_21] : memref<1x1xf32, #tpu.memory_space<smem>>
    } else {
    }
    return
  }
  func.func @transform_0(%arg0: i32) -> (i32, i32) {
    %c0_i32 = arith.constant 0 : i32
    %c0_i32_0 = arith.constant 0 : i32
    return %c0_i32, %arg0 : i32, i32
  }
  func.func @transform_1(%arg0: i32) -> (i32, i32) {
    %c0_i32 = arith.constant 0 : i32
    %c0_i32_0 = arith.constant 0 : i32
    return %c0_i32, %arg0 : i32, i32
  }
  func.func @transform_2(%arg0: i32) -> (i32, i32) {
    %c0_i32 = arith.constant 0 : i32
    %c0_i32_0 = arith.constant 0 : i32
    %c0_i32_1 = arith.constant 0 : i32
    return %c0_i32, %c0_i32_0 : i32, i32
  }
}

</mosaic_0001>

<llo_original>
// kernel: tpu_custom_call.1
$region0: #{tpu_custom_call.1}
  #allocation0 [shape = 'u32[]', space=smem, size = 0x4, offset = 0x4, fixed_abs, tag = 'smem constant byte address 0x4 - core index']
  #allocation1 [shape = 'u32[144,128]{1,0:T(1,128)}', space=vmem, size = 0x12000, scoped, tag = 'internal scratch']
  %s0 = inlined_call_operand.hbm [shape: f32[10,128], index: 0, kind: input, shape index: {}]
  %s1 = inlined_call_operand.vmem [shape: s32[1,128], index: 1, kind: input, shape index: {}]
  %s2 = inlined_call_operand.hbm [shape: f32[1,1], index: 2, kind: output, shape index: {}]
  %s3 = sld [smem:[#allocation0]]
  $region30: #{tpu_custom_call.1} parent=0
    _
  %s5 = ssub.s32 1, %s3
  %s6 = scalar_select 0, %s5, %s3
  $region1: #{tpu_custom_call.1} parent=0
    #allocation2 [shape = 'u8[8192]{0}', space=vmem, size = 0x2000, scoped, tag = 'input window, operand 0, single buffered']
    #allocation3 [shape = 's32[1]{0}', space=sflag, size = 0x4, scoped, tag = 'scoped memory for tpu_custom_call.1']
    #allocation4 [shape = 's32[1]{0}', space=sflag, size = 0x4, scoped, tag = 'scoped memory for tpu_custom_call.1']
    #allocation5 [shape = 'u8[512]{0}', space=smem, size = 0x200, scoped, tag = 'output window, operand 0, single buffered']
    %7 = vsyncpa [#allocation3], 0
    %8 = vsyncpa [#allocation4], 0
    // Predicated region
    $region2: #{tpu_custom_call.1} parent=1 // pred_check
      _
    $region3: #{tpu_custom_call.1} parent=1 // pred_check_branch
      %10 = sbr.rel (0) target = $region5
    $region4: #{tpu_custom_call.1} parent=1 // pred_region
      %s12 = ssub.s32 256, 256
      %13 = vsyncadd [#allocation3], %s12
      %s14 = sshll.u32 [#allocation2], 4
      %s15 = int_to_ptr.vmem [resolvable:$true] %s14
      %20 = dma.hbm_to_vmem [thread:$0]  %s0, 256, %s15, [#allocation3], 128, 128, 8
    $region5: #{tpu_custom_call.1} parent=1 // pred_fallthru
      _
    // Predicated region
    $region6: #{tpu_custom_call.1} parent=1 // pred_check
      _
    $region7: #{tpu_custom_call.1} parent=1 // pred_check_branch
      %22 = sbr.rel (0) target = $region9
    $region8: #{tpu_custom_call.1} parent=1 // pred_region
      _
    $region9: #{tpu_custom_call.1} parent=1 // pred_fallthru
      _
    // Predicated region
    $region10: #{tpu_custom_call.1} parent=1 // pred_check
      _
    $region11: #{tpu_custom_call.1} parent=1 // pred_check_branch
      %24 = sbr.rel (0) target = $region13
    $region12: #{tpu_custom_call.1} parent=1 // pred_region
      %25 = dma.done [#allocation3], 256
    $region13: #{tpu_custom_call.1} parent=1 // pred_fallthru
      _
    %p26 = scmp.eq.s32.totalorder 0, 0
    // Predicated region
    $region14: #{tpu_custom_call.1} parent=1 // pred_check
      %p27 = pneg %p26
    $region15: #{tpu_custom_call.1} parent=1 // pred_check_branch
      %29 = sbr.rel (%p27) target = $region17
    $region16: #{tpu_custom_call.1} parent=1 // pred_region
      %s30 = scalar_lea.smem [#allocation5], 0
      %31 = sst [smem:[%s30]] 0.0
    $region17: #{tpu_custom_call.1} parent=1 // pred_fallthru
      _
    %v32 = vld [vmem:[#allocation2] sm:$0xff]
    %v33 = vld [vmem:[#allocation2 + $0x8] sm:$0x3]
    %v34 = vld [vmem:[%s1] sm:$0x1]
    %vm35 = vcmask 1041408
    %v36 = vsel %vm35, %v33, -inf
    %v37 = vmax.f32 %v32, %v36
    %v38 = vrot.slane %v37, 4
    %v39 = vmax.f32 %v37, %v38
    %v40 = vrot.slane %v39, 2
    %v41 = vmax.f32 %v39, %v40
    %v42 = vrot.slane %v41, 1
    %v43 = vmax.f32 %v41, %v42
    %v44 = vsub.f32 %v32, %v43
    %v45 = vsub.f32 %v33, %v43
    %v46 = vmul.f32 %v44, 1.442695
    %v47 = vpow.pop %v46
    %v48 = vmul.f32 %v45, 1.442695
    %v49 = vpow.pop %v48
    %v50 = vsel %vm35, %v49, 0.0
    %v51 = vadd.f32 %v47, %v50
    %v52 = vrot.slane %v51, 4
    %v53 = vadd.f32 %v51, %v52
    %v54 = vrot.slane %v53, 2
    %v55 = vadd.f32 %v53, %v54
    %v56 = vrot.slane %v55, 1
    %v57 = vadd.f32 %v55, %v56
    %v58 = vlaneseq
    %v59 = vshrl.u32 %v58, 7
    %v60 = vadd.s32 %v59, 8
    %v61 = vlaneseq
    %v62 = vshrl.u32 %v61, 7
    %v63 = vsub.s32 0, %v62
    %v64 = vrot.slane %v34, %v63
    %vm65 = vcmp.eq.s32.totalorder %v59, %v64
    %vm66 = vcmp.eq.s32.totalorder %v60, %v64
    %v67 = vsel %vm65, %v47, 0.0
    %v68 = vsel %vm66, %v49, 0.0
    %v69 = vsel %vm35, %v68, 0.0
    %v70 = vadd.f32 %v67, %v69
    %v71 = vrot.slane %v70, 4
    %v72 = vadd.f32 %v70, %v71
    %v73 = vrot.slane %v72, 2
    %v74 = vadd.f32 %v72, %v73
    %v75 = vrot.slane %v74, 1
    %v76 = vadd.f32 %v74, %v75
    %v77 = vrcp.pop %v57
    %v78 = vmul.f32 %v76, %v77
    %v79 = vsub.f32 1.0, %v78
    %v80 = vlaneseq
    %v81 = vand.u32 %v80, 127
    %s82 = smul.u32 0, 128
    %v83 = vstv %s82
    %v84 = vadd.s32 %v81, %v83
    %vm85 = vcmp.lt.s32.totalorder %v84, 8
    %v86 = vsel %vm85, %v79, 0.0
    %s87 = sld [smem:[#allocation5]]
    %vm88 = vcmask 1040384
    %v89 = vsel %vm88, %v86, 0.0
    %90 = vadd.xlane.f32.xlu0 %v89
    %v91 = vpop.xlane.xlu0 %90
    %v92 = vrot.slane %v91, 4
    %v93 = vadd.f32 %v91, %v92
    %v94 = vrot.slane %v93, 2
    %v95 = vadd.f32 %v93, %v94
    %v96 = vrot.slane %v95, 1
    %v97 = vadd.f32 %v95, %v96
    %s98 = vtos %v97
    %s99 = sadd.f32 %s87, %s98
    %s100 = scalar_lea.smem [#allocation5], 0
    %101 = sst [smem:[%s100]] %s99
    // Predicated region
    $region18: #{tpu_custom_call.1} parent=1 // pred_check
      %p102 = pneg %p26
    $region19: #{tpu_custom_call.1} parent=1 // pred_check_branch
      %104 = sbr.rel (%p102) target = $region21
    $region20: #{tpu_custom_call.1} parent=1 // pred_region
      %s105 = sld [smem:[#allocation5]]
      %s106 = smul.f32 %s105, 0.013888889
      %107 = sst [smem:[%s100]] %s106
    $region21: #{tpu_custom_call.1} parent=1 // pred_fallthru
      _
    // Predicated region
    $region22: #{tpu_custom_call.1} parent=1 // pred_check
      _
    $region23: #{tpu_custom_call.1} parent=1 // pred_check_branch
      %109 = sbr.rel (0) target = $region25
    $region24: #{tpu_custom_call.1} parent=1 // pred_region
      %s111 = ssub.s32 16, 16
      %112 = vsyncadd [#allocation4], %s111
      %115 = dma.smem_to_hbm [#allocation5], 16, %s2, [#allocation4]
    $region25: #{tpu_custom_call.1} parent=1 // pred_fallthru
      _
    // Predicated region
    $region26: #{tpu_custom_call.1} parent=1 // pred_check
      _
    $region27: #{tpu_custom_call.1} parent=1 // pred_check_branch
      %117 = sbr.rel (0) target = $region29
    $region28: #{tpu_custom_call.1} parent=1 // pred_region
      %118 = dma.done [#allocation4], 16
    $region29: #{tpu_custom_call.1} parent=1 // pred_fallthru
      _
    %119 = sfence
    %120 = vsyncpa [#allocation3], 1
    %121 = vsyncpa [#allocation4], 1

</llo_original>
